<compile_context>
chip_gen: v7x
topology: tpu7x:2x2x1
jax: 0.10.0
libtpu: 0.0.40
codegen_flags: <defaults>
</compile_context>

<pallas_src>
import functools

import jax
import jax.numpy as jnp
from jax.experimental import pallas as pl
from jax.experimental.pallas import tpu as pltpu

# ---- model hyperparameters (match nn.Module defaults) ----
MONO_FEATURE = 4
NON_MONO_FEATURE = 4
MONO_HIDDEN = 5
NON_MONO_HIDDEN = 5
BOTTLENECK = 10

# ---- fused-stage dimensions (x-rows ++ y-rows ++ carried ones-row) ----
IN0 = MONO_FEATURE + NON_MONO_FEATURE + 1          # 9  : [mono(4); nonm(4); 1]
H1 = MONO_HIDDEN + NON_MONO_HIDDEN + 1             # 11 : [x(5); y(5); 1]
H2 = 2 * BOTTLENECK + 1                            # 21 : [xb(10); yb(10); 1]
H3 = MONO_HIDDEN + NON_MONO_HIDDEN + 1             # 11 : [x(5); y(5); 1]
OUT = 1

# ---- packed-parameter slab layout (one slot per fused stage) ----
_N_SLOTS = 4
_SLOT_ROWS = 24                                    # >= 21, multiple of 8 sublanes
_SLAB_COLS = 128                                   # one full lane group
_SLAB_SHAPE = (_N_SLOTS * _SLOT_ROWS, _SLAB_COLS)  # (96, 128) f32 = 48 KiB


def _round_up(x, m):
    return (x + m - 1) // m * m


def _mlp_kernel(x_ref, slab_ref, out_ref):
    """x_ref: (9, tile) = [mono; non_mono; ones], batch on lanes.
    slab_ref: (96, 128) packed fused weights (biases folded in).
    out_ref: (1, tile) lane-dense output row."""
    relu = lambda t: jnp.maximum(t, 0.0)
    ht01 = lambda t: jnp.clip(t, 0.0, 1.0)         # F.hardtanh(min=0, max=1)

    def stage(act, slot, out_dim, in_dim):
        r = slot * _SLOT_ROWS                      # static, sublane-aligned
        w = slab_ref[r:r + out_dim, 0:in_dim]      # (out, in)
        return jnp.dot(w, act, preferred_element_type=jnp.float32)

    a = x_ref[...]                                 # (9,  tile)
    a = relu(stage(a, 0, H1, IN0))                 # (11, tile): fc_in pair
    a = ht01(stage(a, 1, H2, H1))                  # (21, tile): submods_out pair
    a = relu(stage(a, 2, H3, H2))                  # (11, tile): submods_in pair
    out_ref[...] = stage(a, 3, OUT, H3).astype(out_ref.dtype)   # heads + sum
    # TODO(synk): normalize_regression=True (sigmoid), compress_non_mono=True,
    # dropout_prob>0 and mono_sub_num>1 paths not emitted (module defaults).


def pack_params(params):
    """One-time packing of PyTorch-layout params (W:(out,in), b:(out,)) into the
    fused block-diagonal slab.  Call once, outside the per-forward path."""
    (w_nm_in, b_nm_in, w_m_in, b_m_in, w_m_out, b_m_out, w_nm_out, b_nm_out,
     w_m_sin, b_m_sin, w_nm_sin, b_nm_sin, w_m_last, b_m_last,
     w_nm_last, b_nm_last) = [jnp.asarray(p, jnp.float32) for p in params]

    z = lambda r, c: jnp.zeros((r, c), jnp.float32)
    col = lambda b: jnp.asarray(b, jnp.float32).reshape(-1, 1)

    def ones_row(width):                           # picks the carried "1" input
        return jnp.concatenate([z(1, width - 1), jnp.ones((1, 1), jnp.float32)], 1)

    # Stage 1 (11, 9): x = mono_fc_in(cat[mono, nonm]); y = non_mono_fc_in(nonm)
    w1 = jnp.concatenate([
        jnp.concatenate([w_m_in, col(b_m_in)], 1),
        jnp.concatenate([z(NON_MONO_HIDDEN, MONO_FEATURE), w_nm_in, col(b_nm_in)], 1),
        ones_row(IN0),
    ], 0)

    # Stage 2 (21, 11): block-diag [mono_submods_out ; non_mono_submods_out]
    w2 = jnp.concatenate([
        jnp.concatenate([w_m_out, z(BOTTLENECK, NON_MONO_HIDDEN), col(b_m_out)], 1),
        jnp.concatenate([z(BOTTLENECK, MONO_HIDDEN), w_nm_out, col(b_nm_out)], 1),
        ones_row(H1),
    ], 0)

    # Stage 3 (11, 21): x = mono_submods_in(cat[x, y]); y = non_mono_submods_in(y)
    w3 = jnp.concatenate([
        jnp.concatenate([w_m_sin, col(b_m_sin)], 1),
        jnp.concatenate([z(NON_MONO_HIDDEN, BOTTLENECK), w_nm_sin, col(b_nm_sin)], 1),
        ones_row(H2),
    ], 0)

    # Stage 4 (1, 11): mono_fc_last(x) + non_mono_fc_last(y), biases summed
    w4 = jnp.concatenate([w_m_last, w_nm_last, col(b_m_last + b_nm_last)], 1)

    slab = jnp.zeros(_SLAB_SHAPE, jnp.float32)
    for slot, w in enumerate([w1, w2, w3, w4]):
        r = slot * _SLOT_ROWS
        o, i = w.shape
        slab = slab.at[r:r + o, 0:i].set(w)
    return slab


@functools.partial(jax.jit, static_argnames=("batch_tile",))
def mlp_relu_dummy_pallas(mono, nonm, slab, *, batch_tile=2048):
    """Forward pass.  `slab` is the pre-packed output of pack_params(params)."""
    assert batch_tile % 128 == 0, "batch_tile must be a multiple of 128 (lane width)"
    B = mono.shape[0]

    # --- tile / grid selection (all static) ---
    bp128 = _round_up(B, 128)
    tile = min(batch_tile, bp128)
    # Keep >= 2 grid steps when the batch allows it: the "parallel" grid axis is
    # how work shards across v7x's 2 TensorCores (harmless on v5e/v6e).
    if tile >= bp128 and bp128 >= 256:
        tile = _round_up(bp128 // 2, 128)
    Bp = _round_up(B, tile)
    grid = (Bp // tile,)

    # --- single fused data-prep pass: [mono; nonm; ones] with batch on lanes ---
    ones = jnp.ones((1, B), jnp.float32)
    x_t = jnp.concatenate([mono.astype(jnp.float32).T,
                           nonm.astype(jnp.float32).T, ones], axis=0)   # (9, B)
    if Bp != B:
        x_t = jnp.pad(x_t, ((0, 0), (0, Bp - B)))                        # (9, Bp)

    out = pl.pallas_call(
        _mlp_kernel,
        out_shape=jax.ShapeDtypeStruct((1, Bp), jnp.float32),
        grid_spec=pltpu.PrefetchScalarGridSpec(
            num_scalar_prefetch=0,
            grid=grid,
            in_specs=[
                pl.BlockSpec((IN0, tile), lambda i: (0, i)),      # activations
                pl.BlockSpec(_SLAB_SHAPE, lambda i: (0, 0)),      # const weight slab
            ],
            out_specs=pl.BlockSpec((1, tile), lambda i: (0, i)),  # lane-dense store
        ),
        # VMEM per step is tiny (< 0.5 MiB even at tile=4096) -> defaults are fine
        # on v5e/v6e/v7x; no vmem_limit_bytes needed.
        compiler_params=pltpu.CompilerParams(
            dimension_semantics=("parallel",)),
    )(x_t, slab)

    return out[:, :B].T                                                  # (B, 1)


def _ref_forward(mono, nonm, params):
    """Pure-JAX reference mirroring the PyTorch forward (W:(out,in), b:(out,))."""
    (w_nm_in, b_nm_in, w_m_in, b_m_in, w_m_out, b_m_out, w_nm_out, b_nm_out,
     w_m_sin, b_m_sin, w_nm_sin, b_nm_sin, w_m_last, b_m_last,
     w_nm_last, b_nm_last) = params
    lin = lambda a, w, b: a @ w.T + b
    relu = lambda t: jnp.maximum(t, 0.0)
    ht = lambda t: jnp.clip(t, 0.0, 1.0)
    y = relu(lin(nonm, w_nm_in, b_nm_in))
    x = relu(lin(jnp.concatenate([mono, nonm], axis=1), w_m_in, b_m_in))
    x = ht(lin(x, w_m_out, b_m_out))
    y = ht(lin(y, w_nm_out, b_nm_out))
    x = relu(lin(jnp.concatenate([x, y], axis=1), w_m_sin, b_m_sin))
    y = relu(lin(y, w_nm_sin, b_nm_sin))
    return lin(x, w_m_last, b_m_last) + lin(y, w_nm_last, b_nm_last)


def _make_params(key):
    """Deterministic synthetic weights in PyTorch layout: W (out, in), b (out,)."""
    shapes = [
        (NON_MONO_HIDDEN, NON_MONO_FEATURE),              # non_mono_fc_in
        (MONO_HIDDEN, MONO_FEATURE + NON_MONO_FEATURE),   # mono_fc_in
        (BOTTLENECK, MONO_HIDDEN),                        # mono_submods_out[0]
        (BOTTLENECK, NON_MONO_HIDDEN),                    # non_mono_submods_out[0]
        (MONO_HIDDEN, 2 * BOTTLENECK),                    # mono_submods_in[0]
        (NON_MONO_HIDDEN, BOTTLENECK),                    # non_mono_submods_in[0]
        (1, MONO_HIDDEN),                                 # mono_fc_last
        (1, NON_MONO_HIDDEN),                             # non_mono_fc_last
    ]
    params = []
    for shp in shapes:
        key, kw, kb = jax.random.split(key, 3)
        w = jax.random.normal(kw, shp, dtype=jnp.float32) * 0.2
        b = jax.random.normal(kb, (shp[0],), dtype=jnp.float32) * 0.1
        params += [w, b]
    return params


if __name__ == "__main__":
    key = jax.random.PRNGKey(0)
    k_mono, k_nonm, k_params = jax.random.split(key, 3)

    # Non-multiple-of-tile batch: exercises the padding path and a 2-step
    # parallel grid (600 -> tile 384, padded to 768) while staying small.
    B = 600
    mono = jax.random.normal(k_mono, (B, MONO_FEATURE), dtype=jnp.float32)
    nonm = jax.random.normal(k_nonm, (B, NON_MONO_FEATURE), dtype=jnp.float32)
    params = _make_params(k_params)

    slab = pack_params(params)                 # one-time packing, hoisted out of forward
    out = mlp_relu_dummy_pallas(mono, nonm, slab, batch_tile=2048)
    out = jax.block_until_ready(out)

    ref = _ref_forward(mono, nonm, params)
    assert out.shape == (B, 1)
    assert jnp.allclose(out, ref, atol=1e-4, rtol=1e-4), (out[:4], ref[:4])
    print("KERNEL_OK")
</pallas_src>

<mosaic_0001>
module attributes {stable_mosaic.version = 11 : i64} {
  func.func @_mlp_kernel(%arg0: i32, %arg1: memref<9x384xf32, #tpu.memory_space<vmem>>, %arg2: memref<96x128xf32, #tpu.memory_space<vmem>>, %arg3: memref<1x384xf32, #tpu.memory_space<vmem>>) attributes {dimension_semantics = [#tpu.dimension_semantics<parallel>], iteration_bounds = array<i64: 2>, scalar_prefetch = 0 : i64, scratch_operands = 0 : i64, tpu.core_type = #tpu.core_type<tc>, window_params = [{transform_indices = @transform_0, window_bounds = array<i64: 9, 384>}, {pipeline_mode = #tpu.pipeline_mode<synchronous>, transform_indices = @transform_1, window_bounds = array<i64: 96, 128>}, {transform_indices = @transform_2, window_bounds = array<i64: 1, 384>}]} {
    %c0 = arith.constant 0 : index
    %c0_0 = arith.constant 0 : index
    %0 = vector.load %arg1[%c0, %c0_0] : memref<9x384xf32, #tpu.memory_space<vmem>>, vector<9x384xf32>
    %c0_1 = arith.constant 0 : index
    %c0_2 = arith.constant 0 : index
    %1 = vector.load %arg2[%c0_1, %c0_2] : memref<96x128xf32, #tpu.memory_space<vmem>>, vector<11x9xf32>
    %cst = arith.constant dense<0.000000e+00> : vector<11x384xf32>
    %2 = tpu.matmul %1, %0, %cst {dimension_numbers = #tpu.dot_dimension_numbers<[1], [0], [0], [1], [0, 0, 1, 1], [], []>} : vector<11x9xf32>, vector<9x384xf32>, vector<11x384xf32> -> vector<11x384xf32>
    %cst_3 = arith.constant 0.000000e+00 : f32
    %3 = vector.broadcast %cst_3 : f32 to vector<11x384xf32>
    %4 = arith.maximumf %2, %3 : vector<11x384xf32>
    %c24 = arith.constant 24 : index
    %c0_4 = arith.constant 0 : index
    %5 = vector.load %arg2[%c24, %c0_4] : memref<96x128xf32, #tpu.memory_space<vmem>>, vector<21x11xf32>
    %cst_5 = arith.constant dense<0.000000e+00> : vector<21x384xf32>
    %6 = tpu.matmul %5, %4, %cst_5 {dimension_numbers = #tpu.dot_dimension_numbers<[1], [0], [0], [1], [0, 0, 1, 1], [], []>} : vector<21x11xf32>, vector<11x384xf32>, vector<21x384xf32> -> vector<21x384xf32>
    %cst_6 = arith.constant 0.000000e+00 : f32
    %cst_7 = arith.constant 1.000000e+00 : f32
    %7 = vector.broadcast %cst_6 : f32 to vector<21x384xf32>
    %8 = arith.maximumf %7, %6 : vector<21x384xf32>
    %9 = vector.broadcast %cst_7 : f32 to vector<21x384xf32>
    %10 = arith.minimumf %9, %8 : vector<21x384xf32>
    %c48 = arith.constant 48 : index
    %c0_8 = arith.constant 0 : index
    %11 = vector.load %arg2[%c48, %c0_8] : memref<96x128xf32, #tpu.memory_space<vmem>>, vector<11x21xf32>
    %cst_9 = arith.constant dense<0.000000e+00> : vector<11x384xf32>
    %12 = tpu.matmul %11, %10, %cst_9 {dimension_numbers = #tpu.dot_dimension_numbers<[1], [0], [0], [1], [0, 0, 1, 1], [], []>} : vector<11x21xf32>, vector<21x384xf32>, vector<11x384xf32> -> vector<11x384xf32>
    %cst_10 = arith.constant 0.000000e+00 : f32
    %13 = vector.broadcast %cst_10 : f32 to vector<11x384xf32>
    %14 = arith.maximumf %12, %13 : vector<11x384xf32>
    %c72 = arith.constant 72 : index
    %c0_11 = arith.constant 0 : index
    %15 = vector.load %arg2[%c72, %c0_11] : memref<96x128xf32, #tpu.memory_space<vmem>>, vector<1x11xf32>
    %cst_12 = arith.constant dense<0.000000e+00> : vector<1x384xf32>
    %16 = tpu.matmul %15, %14, %cst_12 {dimension_numbers = #tpu.dot_dimension_numbers<[1], [0], [0], [1], [0, 0, 1, 1], [], []>} : vector<1x11xf32>, vector<11x384xf32>, vector<1x384xf32> -> vector<1x384xf32>
    %c0_13 = arith.constant 0 : index
    %c0_14 = arith.constant 0 : index
    %17 = vector.load %arg3[%c0_13, %c0_14] : memref<1x384xf32, #tpu.memory_space<vmem>>, vector<1x384xf32>
    tpu.vector_store %arg3[%c0_13, %c0_14], %16 {strides = array<i32>} : memref<1x384xf32, #tpu.memory_space<vmem>>, vector<1x384xf32>,
    return
  }
  func.func @transform_0(%arg0: i32) -> (i32, i32) {
    %c0_i32 = arith.constant 0 : i32
    %c0_i32_0 = arith.constant 0 : i32
    return %c0_i32, %arg0 : i32, i32
  }
  func.func @transform_1(%arg0: i32) -> (i32, i32) {
    %c0_i32 = arith.constant 0 : i32
    %c0_i32_0 = arith.constant 0 : i32
    %c0_i32_1 = arith.constant 0 : i32
    return %c0_i32, %c0_i32_0 : i32, i32
  }
  func.func @transform_2(%arg0: i32) -> (i32, i32) {
    %c0_i32 = arith.constant 0 : i32
    %c0_i32_0 = arith.constant 0 : i32
    return %c0_i32, %arg0 : i32, i32
  }
}

</mosaic_0001>

<llo_original>
// kernel: mlp_relu_dummy_pallas.1
$region0: #{mlp_relu_dummy_pallas.1}
  #allocation0 [shape = 'u32[]', space=smem, size = 0x4, offset = 0x4, fixed_abs, tag = 'smem constant byte address 0x4 - core index']
  #allocation1 [shape = 'u32[144,128]{1,0:T(1,128)}', space=vmem, size = 0x12000, scoped, tag = 'internal scratch']
  %s0 = inlined_call_operand.vmem [shape: f32[9,768], index: 0, kind: input, shape index: {}]
  %s1 = inlined_call_operand.vmem [shape: f32[96,128], index: 1, kind: input, shape index: {}]
  %s2 = inlined_call_operand.vmem [shape: f32[1,768], index: 2, kind: output, shape index: {}]
  %s3 = sld [smem:[#allocation0]]
  $region64: #{mlp_relu_dummy_pallas.1} parent=0
    _
  %s5 = ssub.s32 1, %s3
  %s6 = scalar_select 0, %s5, %s3
  $region1: #{mlp_relu_dummy_pallas.1} parent=0
    #allocation2 [shape = 'u8[49152]{0}', space=vmem, size = 0xc000, scoped, tag = 'input window, operand 0']
    loop: start=0, step=1, limit=4
    $region2: #{mlp_relu_dummy_pallas.1} parent=1 // loop_pre_header
      _
    $region3: #{mlp_relu_dummy_pallas.1} parent=1 // loop_header
      %s8 = sphi 0, %s12
      %p9 = scmp.ge.s32.totalorder %s8, 4
      %s18 = sphi 0, %s20
      %s21 = sphi 0, %s18
      %s22 = sphi 0, %s21
      %s38 = sphi 0, %s22
      %s42 = sphi 0, %s42
      %s44 = sphi 0, %s42
      %s45 = sphi 0, %s44
      %s59 = sphi 0, %s45
      %s65 = sphi 0, %s67
      %s68 = sphi 0, %s65
      %s69 = sphi 0, %s68
      %s85 = sphi 0, %s69
    $region4: #{mlp_relu_dummy_pallas.1} parent=1 // loop_header_branch
      %11 = sbr.rel (%p9) target = $region8
    $region5: #{mlp_relu_dummy_pallas.1} parent=1 // loop_body
      %s13 = ssub.s32 %s8, 1
      %s14 = ssub.s32 %s8, 2
      %s15 = sadd.s32 %s8, 1
      %s16 = ssub.s32 %s8, %s15
      %p17 = scmp.eq.s32.totalorder %s16, 0
      %s19 = sadd.s32 %s18, 1
      %s20 = scalar_select %p17, %s18, %s19
      %p23 = pneg %p17
      %p24 = scmp.eq.s32.totalorder %s8, 1
      %p25 = por %p23, %p24
      %p26 = scmp.ne.s32.totalorder %s18, %s21
      %p27 = scmp.eq.s32.totalorder %s8, 0
      %p28 = por %p26, %p27
      %p29 = scmp.ne.s32.totalorder %s18, %s21
      %p30 = scmp.eq.s32.totalorder %s13, 1
      %p31 = por %p29, %p30
      %p32 = scmp.ne.s32.totalorder %s21, %s22
      %p33 = scmp.eq.s32.totalorder %s13, 0
      %p34 = por %p32, %p33
      %p35 = scmp.ne.s32.totalorder %s21, %s22
      %p36 = scmp.eq.s32.totalorder %s14, 1
      %p37 = por %p35, %p36
      %p39 = scmp.ne.s32.totalorder %s22, %s38
      %p40 = scmp.eq.s32.totalorder %s14, 0
      %p41 = por %p39, %p40
      %s43 = sadd.s32 %s42, 1
      %p46 = scmp.eq.s32.totalorder %s8, 1
      %p47 = scmp.ne.s32.totalorder %s42, %s44
      %p48 = scmp.eq.s32.totalorder %s8, 0
      %p49 = por %p47, %p48
      %p50 = scmp.ne.s32.totalorder %s42, %s44
      %p51 = scmp.eq.s32.totalorder %s13, 1
      %p52 = por %p50, %p51
      %p53 = scmp.ne.s32.totalorder %s44, %s45
      %p54 = scmp.eq.s32.totalorder %s13, 0
      %p55 = por %p53, %p54
      %p56 = scmp.ne.s32.totalorder %s44, %s45
      %p57 = scmp.eq.s32.totalorder %s14, 1
      %p58 = por %p56, %p57
      %p60 = scmp.ne.s32.totalorder %s45, %s59
      %p61 = scmp.eq.s32.totalorder %s14, 0
      %p62 = por %p60, %p61
      %s63 = ssub.s32 %s8, %s15
      %p64 = scmp.eq.s32.totalorder %s63, 0
      %s66 = sadd.s32 %s65, 1
      %s67 = scalar_select %p64, %s65, %s66
      %p70 = pneg %p64
      %p71 = scmp.eq.s32.totalorder %s8, 1
      %p72 = por %p70, %p71
      %p73 = scmp.ne.s32.totalorder %s65, %s68
      %p74 = scmp.eq.s32.totalorder %s8, 0
      %p75 = por %p73, %p74
      %p76 = scmp.ne.s32.totalorder %s65, %s68
      %p77 = scmp.eq.s32.totalorder %s13, 1
      %p78 = por %p76, %p77
      %p79 = scmp.ne.s32.totalorder %s68, %s69
      %p80 = scmp.eq.s32.totalorder %s13, 0
      %p81 = por %p79, %p80
      %p82 = scmp.ne.s32.totalorder %s68, %s69
      %p83 = scmp.eq.s32.totalorder %s14, 1
      %p84 = por %p82, %p83
      %p86 = scmp.ne.s32.totalorder %s69, %s85
      %p87 = scmp.eq.s32.totalorder %s14, 0
      %p88 = por %p86, %p87
      %p89 = scmp.le.s32.totalorder 1, %s8
      %p90 = scmp.lt.s32.totalorder %s8, 3
      %p91 = pnand %p89, %p90
      %p92 = pneg %p91
      // Predicated region
      $region9: #{mlp_relu_dummy_pallas.1} parent=5 // pred_check
        _
      $region10: #{mlp_relu_dummy_pallas.1} parent=5 // pred_check_branch
        %94 = sbr.rel (%p91) target = $region12
      $region11: #{mlp_relu_dummy_pallas.1} parent=5 // pred_region
        %s95 = ssub.s32 %s8, 1
        // Predicated region
        $region13: #{mlp_relu_dummy_pallas.1} parent=11 // pred_check
          %p96 = pneg %p55
        $region14: #{mlp_relu_dummy_pallas.1} parent=11 // pred_check_branch
          %98 = sbr.rel (%p96) target = $region16
        $region15: #{mlp_relu_dummy_pallas.1} parent=11 // pred_region
          _
        $region16: #{mlp_relu_dummy_pallas.1} parent=11 // pred_fallthru
          _
      $region12: #{mlp_relu_dummy_pallas.1} parent=5 // pred_fallthru
        _
      %p99 = scmp.lt.s32.totalorder %s8, 2
      // Predicated region
      $region17: #{mlp_relu_dummy_pallas.1} parent=5 // pred_check
        %p100 = pneg %p99
      $region18: #{mlp_relu_dummy_pallas.1} parent=5 // pred_check_branch
        %102 = sbr.rel (%p100) target = $region20
      $region19: #{mlp_relu_dummy_pallas.1} parent=5 // pred_region
        // Predicated region
        $region21: #{mlp_relu_dummy_pallas.1} parent=19 // pred_check
          %p103 = pneg %p28
        $region22: #{mlp_relu_dummy_pallas.1} parent=19 // pred_check_branch
          %105 = sbr.rel (%p103) target = $region24
        $region23: #{mlp_relu_dummy_pallas.1} parent=19 // pred_region
          %s106 = sand.u32 %s18, 1
          %s107 = sand.u32 %s18, 1
          %s108 = smul.addr %s107, 48
          %s109 = scalar_lea.vmem [#allocation2], %s108
          %s110 = smul.u32 3, %s8
          %s111 = smul.addr %s110, 8
          %s112 = scalar_lea.vmem %s0, %s111
          // Predicated region
          $region25: #{mlp_relu_dummy_pallas.1} parent=23 // pred_check
            _
          $region26: #{mlp_relu_dummy_pallas.1} parent=23 // pred_check_branch
            %114 = sbr.rel (0) target = $region28
          $region27: #{mlp_relu_dummy_pallas.1} parent=23 // pred_region
            // Predicated region
            $region29: #{mlp_relu_dummy_pallas.1} parent=27 // pred_check
              _
            $region30: #{mlp_relu_dummy_pallas.1} parent=27 // pred_check_branch
              %116 = sbr.rel (0) target = $region32
            $region31: #{mlp_relu_dummy_pallas.1} parent=27 // pred_region
              loop: start=0, step=1, limit=1
              $region33: #{mlp_relu_dummy_pallas.1} parent=31 // loop_pre_header
                _
              $region34: #{mlp_relu_dummy_pallas.1} parent=31 // loop_header
                %s118 = sphi 0, %s122
                %p119 = scmp.ge.s32.totalorder %s118, 1
                %s123 = sphi %s112, %s112
                %s124 = sphi %s109, %s109
              $region35: #{mlp_relu_dummy_pallas.1} parent=31 // loop_header_branch
                %121 = sbr.rel (%p119) target = $region39
              $region36: #{mlp_relu_dummy_pallas.1} parent=31 // loop_body
                %v125 = vld [vmem:[%s123] sm:$0xff]
                %126 = vst [vmem:[%s124] sm:$0xff] %v125
                %v127 = vld [vmem:[%s123 + $0x8] sm:$0xff]
                %128 = vst [vmem:[%s124 + $0x8] sm:$0xff] %v127
                %v129 = vld [vmem:[%s123 + $0x10] sm:$0xff]
                %130 = vst [vmem:[%s124 + $0x10] sm:$0xff] %v129
                %v131 = vld [vmem:[%s123 + $0x30] sm:$0xff]
                %132 = vst [vmem:[%s124 + $0x18] sm:$0xff] %v131
                %v133 = vld [vmem:[%s123 + $0x38] sm:$0xff]
                %134 = vst [vmem:[%s124 + $0x20] sm:$0xff] %v133
                %v135 = vld [vmem:[%s123 + $0x40] sm:$0xff]
                %136 = vst [vmem:[%s124 + $0x28] sm:$0xff] %v135
              $region37: #{mlp_relu_dummy_pallas.1} parent=31 // loop_footer
                %s122 = sadd.s32 1, %s118
              $region38: #{mlp_relu_dummy_pallas.1} parent=31 // loop_footer_branch
                %117 = sbr.rel target = $region34
              $region39: #{mlp_relu_dummy_pallas.1} parent=31 // loop_exit
                _
            $region32: #{mlp_relu_dummy_pallas.1} parent=27 // pred_fallthru
              _
            // Predicated region
            $region40: #{mlp_relu_dummy_pallas.1} parent=27 // pred_check
              _
            $region41: #{mlp_relu_dummy_pallas.1} parent=27 // pred_check_branch
              %138 = sbr.rel target = $region43
            $region42: #{mlp_relu_dummy_pallas.1} parent=27 // pred_region
              _
            $region43: #{mlp_relu_dummy_pallas.1} parent=27 // pred_fallthru
              _
          $region28: #{mlp_relu_dummy_pallas.1} parent=23 // pred_fallthru
            _
          %139 = vnop
        $region24: #{mlp_relu_dummy_pallas.1} parent=19 // pred_fallthru
          _
      $region20: #{mlp_relu_dummy_pallas.1} parent=5 // pred_fallthru
        _
      %p140 = scmp.le.s32.totalorder 1, %s8
      %p141 = scmp.lt.s32.totalorder %s8, 3
      %p142 = pnand %p140, %p141
      %p143 = pneg %p142
      // Predicated region
      $region44: #{mlp_relu_dummy_pallas.1} parent=5 // pred_check
        _
      $region45: #{mlp_relu_dummy_pallas.1} parent=5 // pred_check_branch
        %145 = sbr.rel (%p142) target = $region47
      $region46: #{mlp_relu_dummy_pallas.1} parent=5 // pred_region
        %s146 = ssub.s32 %s8, 1
        %s147 = sand.u32 %s21, 1
        %s148 = sand.u32 %s21, 1
        %s149 = smul.addr %s148, 48
        %s150 = scalar_lea.vmem [#allocation2], %s149
        // Predicated region
        $region48: #{mlp_relu_dummy_pallas.1} parent=46 // pred_check
          %p151 = pneg %p34
        $region49: #{mlp_relu_dummy_pallas.1} parent=46 // pred_check_branch
          %153 = sbr.rel (%p151) target = $region51
        $region50: #{mlp_relu_dummy_pallas.1} parent=46 // pred_region
          _
        $region51: #{mlp_relu_dummy_pallas.1} parent=46 // pred_fallthru
          _
        %s154 = sand.u32 %s21, 1
        %s155 = sand.u32 %s21, 1
        %s156 = smul.addr %s155, 48
        %s157 = scalar_lea.vmem [#allocation2], %s156
        %p158 = pneg %p34
        %p159 = pneg %p31
        %p160 = pneg %p55
        %p161 = pneg %p52
        %p162 = pneg %p81
        %p163 = pneg %p78
        %s164 = smul.u32 3, %s13
        %p165 = scmp.lt.s32.totalorder %s164, 5
        %s166 = scalar_select %p165, %s164, 5
        %s167 = scalar_lea.vmem %s2, %s166
        %s168 = smul.u32 3, %s13
        %s169 = smul.u32 3, %s13
        %p170 = scmp.lt.s32.totalorder %s169, 5
        %s171 = scalar_select %p170, %s169, 5
        %s172 = scalar_lea.vmem %s2, %s171
        %s173 = smul.u32 3, %s13
        %v174 = vld [vmem:[%s150] sm:$0xff]
        %v175 = vld [vmem:[%s150 + $0x8] sm:$0xff]
        %v176 = vld [vmem:[%s150 + $0x10] sm:$0xff]
        %v177 = vld [vmem:[%s150 + $0x18] sm:$0x1]
        %v178 = vld [vmem:[%s150 + $0x20] sm:$0x1]
        %v179 = vld [vmem:[%s150 + $0x28] sm:$0x1]
        %v180 = vld [vmem:[%s1] sm:$0xff]
        %v181 = vld [vmem:[%s1 + $0x8] sm:$0x7]
        %vm182 = vcmask 72704
        %v184 = vsel %vm182, %v180, 0
        %v187 = vsel %vm182, %v181, 0
        %vm189 = vcmask 1040384
        %v191 = vsel %vm189, %v177, 0
        %v194 = vsel %vm189, %v178, 0
        %v197 = vsel %vm189, %v179, 0
        %199 = vmatprep.subr.mxu0 %v175
        %200 = vmatpush1.msra.mxu0 %v174
        %201 = vmatprep.subr.mxu0 %v194
        %202 = vmatpush1.msra.mxu0 %v191
        %203 = vmatprep.subr.mxu0 0.0
        %204 = vmatpush1.msra.mxu0 0.0
        %205 = vmatprep.subr.mxu0 0.0
        %206 = vmatpush1.msra.mxu0 0.0
        %207 = vmatprep.subr.mxu0 0.0
        %208 = vmatpush1.msra.mxu0 0.0
        %209 = vmatprep.subr.mxu0 0.0
        %210 = vmatpush1.msra.mxu0 0.0
        %211 = vmatprep.subr.mxu0 0.0
        %212 = vmatpush1.msra.mxu0 0.0
        %213 = vmatprep.subr.mxu0 0.0
        %214 = vmatpush1.msra.mxu0 0.0
        %215 = vmatprep.subr.mxu0 0.0
        %216 = vmatpush1.msra.mxu0 0.0
        %217 = vmatprep.subr.mxu0 0.0
        %218 = vmatpush1.msra.mxu0 0.0
        %219 = vmatprep.subr.mxu0 0.0
        %220 = vmatpush1.msra.mxu0 0.0
        %221 = vmatprep.subr.mxu0 0.0
        %222 = vmatpush1.msra.mxu0 0.0
        %223 = vmatprep.subr.mxu0 0.0
        %224 = vmatpush1.msra.mxu0 0.0
        %225 = vmatprep.subr.mxu0 0.0
        %226 = vmatpush1.msra.mxu0 0.0
        %227 = vmatprep.subr.mxu0 0.0
        %228 = vmatpush1.msra.mxu0 0.0
        %229 = vmatprep.subr.mxu0 0.0
        %230 = vmatpush1.msra.mxu0 0.0
        %231 = vmatprep.subr.mxu0 0.0
        %232 = vmatpush1.msra.mxu0 0.0
        %233 = vmatprep.subr.mxu0 0.0
        %234 = vmatpush1.msra.mxu0 0.0
        %235 = vmatprep.subr.mxu0 0.0
        %236 = vmatpush1.msra.mxu0 0.0
        %237 = vmatprep.subr.mxu0 0.0
        %238 = vmatpush1.msra.mxu0 0.0
        %239 = vmatprep.subr.mxu0 0.0
        %240 = vmatpush1.msra.mxu0 0.0
        %241 = vmatprep.subr.mxu0 0.0
        %242 = vmatpush1.msra.mxu0 0.0
        %243 = vmatprep.subr.mxu0 0.0
        %244 = vmatpush1.msra.mxu0 0.0
        %245 = vmatprep.subr.mxu0 0.0
        %246 = vmatpush1.msra.mxu0 0.0
        %247 = vmatprep.subr.mxu0 0.0
        %248 = vmatpush1.msra.mxu0 0.0
        %249 = vmatprep.subr.mxu0 0.0
        %250 = vmatpush1.msra.mxu0 0.0
        %251 = vmatprep.subr.mxu0 0.0
        %252 = vmatpush1.msra.mxu0 0.0
        %253 = vmatprep.subr.mxu0 0.0
        %254 = vmatpush1.msra.mxu0 0.0
        %255 = vmatprep.subr.mxu0 0.0
        %256 = vmatpush1.msra.mxu0 0.0
        %257 = vmatprep.subr.mxu0 0.0
        %258 = vmatpush1.msra.mxu0 0.0
        %259 = vmatprep.subr.mxu0 0.0
        %260 = vmatpush1.msra.mxu0 0.0
        %261 = vmatprep.subr.mxu0 0.0
        %262 = vmatpush1.msra.mxu0 0.0
        %263 = vmatprep.mubr.f32.mxu0 0.0
        %264 = vmatmul.mubr.f32.gmra.mrb[0].mxu0 %v184
        %v265 = vpop.f32.mrb[0].mxu0
        %v266 = vadd.f32 0.0, %v265
        %v267 = vpop.f32.mrb[0].mxu0
        %v268 = vadd.f32 0.0, %v267
        %269 = vmatprep.mubr.f32.mxu0 0.0
        %270 = vmatmul.mubr.f32.gmra.mrb[0].mxu0 %v187
        %v271 = vpop.f32.mrb[0].mxu0
        %v272 = vadd.f32 0.0, %v271
        %v273 = vpop.f32.mrb[0].mxu0
        %v274 = vadd.f32 0.0, %v273
        %275 = vdwg.mxu0
        %276 = vmatprep.subr.mxu0 0.0
        %277 = vmatpush1.msra.mxu0 %v176
        %278 = vmatprep.subr.mxu0 0.0
        %279 = vmatpush1.msra.mxu0 %v197
        %280 = vmatprep.subr.mxu0 0.0
        %281 = vmatpush1.msra.mxu0 0.0
        %282 = vmatprep.subr.mxu0 0.0
        %283 = vmatpush1.msra.mxu0 0.0
        %284 = vmatprep.subr.mxu0 0.0
        %285 = vmatpush1.msra.mxu0 0.0
        %286 = vmatprep.subr.mxu0 0.0
        %287 = vmatpush1.msra.mxu0 0.0
        %288 = vmatprep.subr.mxu0 0.0
        %289 = vmatpush1.msra.mxu0 0.0
        %290 = vmatprep.subr.mxu0 0.0
        %291 = vmatpush1.msra.mxu0 0.0
        %292 = vmatprep.subr.mxu0 0.0
        %293 = vmatpush1.msra.mxu0 0.0
        %294 = vmatprep.subr.mxu0 0.0
        %295 = vmatpush1.msra.mxu0 0.0
        %296 = vmatprep.subr.mxu0 0.0
        %297 = vmatpush1.msra.mxu0 0.0
        %298 = vmatprep.subr.mxu0 0.0
        %299 = vmatpush1.msra.mxu0 0.0
        %300 = vmatprep.subr.mxu0 0.0
        %301 = vmatpush1.msra.mxu0 0.0
        %302 = vmatprep.subr.mxu0 0.0
        %303 = vmatpush1.msra.mxu0 0.0
        %304 = vmatprep.subr.mxu0 0.0
        %305 = vmatpush1.msra.mxu0 0.0
        %306 = vmatprep.subr.mxu0 0.0
        %307 = vmatpush1.msra.mxu0 0.0
        %308 = vmatprep.subr.mxu0 0.0
        %309 = vmatpush1.msra.mxu0 0.0
        %310 = vmatprep.subr.mxu0 0.0
        %311 = vmatpush1.msra.mxu0 0.0
        %312 = vmatprep.subr.mxu0 0.0
        %313 = vmatpush1.msra.mxu0 0.0
        %314 = vmatprep.subr.mxu0 0.0
        %315 = vmatpush1.msra.mxu0 0.0
        %316 = vmatprep.subr.mxu0 0.0
        %317 = vmatpush1.msra.mxu0 0.0
        %318 = vmatprep.subr.mxu0 0.0
        %319 = vmatpush1.msra.mxu0 0.0
        %320 = vmatprep.subr.mxu0 0.0
        %321 = vmatpush1.msra.mxu0 0.0
        %322 = vmatprep.subr.mxu0 0.0
        %323 = vmatpush1.msra.mxu0 0.0
        %324 = vmatprep.subr.mxu0 0.0
        %325 = vmatpush1.msra.mxu0 0.0
        %326 = vmatprep.subr.mxu0 0.0
        %327 = vmatpush1.msra.mxu0 0.0
        %328 = vmatprep.subr.mxu0 0.0
        %329 = vmatpush1.msra.mxu0 0.0
        %330 = vmatprep.subr.mxu0 0.0
        %331 = vmatpush1.msra.mxu0 0.0
        %332 = vmatprep.subr.mxu0 0.0
        %333 = vmatpush1.msra.mxu0 0.0
        %334 = vmatprep.subr.mxu0 0.0
        %335 = vmatpush1.msra.mxu0 0.0
        %336 = vmatprep.subr.mxu0 0.0
        %337 = vmatpush1.msra.mxu0 0.0
        %338 = vmatprep.subr.mxu0 0.0
        %339 = vmatpush1.msra.mxu0 0.0
        %340 = vmatprep.mubr.f32.mxu0 0.0
        %341 = vmatmul.mubr.f32.gmra.mrb[0].mxu0 %v184
        %v342 = vpop.f32.mrb[0].mxu0
        %v343 = vadd.f32 0.0, %v342
        %v344 = vpop.f32.mrb[0].mxu0
        %345 = vmatprep.mubr.f32.mxu0 0.0
        %346 = vmatmul.mubr.f32.gmra.mrb[0].mxu0 %v187
        %v347 = vpop.f32.mrb[0].mxu0
        %v348 = vadd.f32 0.0, %v347
        %v349 = vpop.f32.mrb[0].mxu0
        %350 = vdwg.mxu0
        %v351 = vmax.f32 %v266, 0.0
        %v352 = vmax.f32 %v268, 0.0
        %v353 = vmax.f32 %v343, 0.0
        %v354 = vmax.f32 %v272, 0.0
        %v355 = vmax.f32 %v274, 0.0
        %v356 = vmax.f32 %v348, 0.0
        %v357 = vld [vmem:[%s1 + $0x18] sm:$0xff]
        %v358 = vld [vmem:[%s1 + $0x20] sm:$0xff]
        %v359 = vld [vmem:[%s1 + $0x28] sm:$0x1f]
        %vm360 = vcmask 89088
        %v362 = vsel %vm360, %v357, 0
        %v365 = vsel %vm360, %v358, 0
        %v368 = vsel %vm360, %v359, 0
        %vm370 = vcmask 1042432
        %v372 = vsel %vm370, %v354, 0
        %v375 = vsel %vm370, %v355, 0
        %v378 = vsel %vm370, %v356, 0
        %380 = vmatprep.subr.mxu0 %v352
        %381 = vmatpush1.msra.mxu0 %v351
        %382 = vmatprep.subr.mxu0 %v375
        %383 = vmatpush1.msra.mxu0 %v372
        %384 = vmatprep.subr.mxu0 0.0
        %385 = vmatpush1.msra.mxu0 0.0
        %386 = vmatprep.subr.mxu0 0.0
        %387 = vmatpush1.msra.mxu0 0.0
        %388 = vmatprep.subr.mxu0 0.0
        %389 = vmatpush1.msra.mxu0 0.0
        %390 = vmatprep.subr.mxu0 0.0
        %391 = vmatpush1.msra.mxu0 0.0
        %392 = vmatprep.subr.mxu0 0.0
        %393 = vmatpush1.msra.mxu0 0.0
        %394 = vmatprep.subr.mxu0 0.0
        %395 = vmatpush1.msra.mxu0 0.0
        %396 = vmatprep.subr.mxu0 0.0
        %397 = vmatpush1.msra.mxu0 0.0
        %398 = vmatprep.subr.mxu0 0.0
        %399 = vmatpush1.msra.mxu0 0.0
        %400 = vmatprep.subr.mxu0 0.0
        %401 = vmatpush1.msra.mxu0 0.0
        %402 = vmatprep.subr.mxu0 0.0
        %403 = vmatpush1.msra.mxu0 0.0
        %404 = vmatprep.subr.mxu0 0.0
        %405 = vmatpush1.msra.mxu0 0.0
        %406 = vmatprep.subr.mxu0 0.0
        %407 = vmatpush1.msra.mxu0 0.0
        %408 = vmatprep.subr.mxu0 0.0
        %409 = vmatpush1.msra.mxu0 0.0
        %410 = vmatprep.subr.mxu0 0.0
        %411 = vmatpush1.msra.mxu0 0.0
        %412 = vmatprep.subr.mxu0 0.0
        %413 = vmatpush1.msra.mxu0 0.0
        %414 = vmatprep.subr.mxu0 0.0
        %415 = vmatpush1.msra.mxu0 0.0
        %416 = vmatprep.subr.mxu0 0.0
        %417 = vmatpush1.msra.mxu0 0.0
        %418 = vmatprep.subr.mxu0 0.0
        %419 = vmatpush1.msra.mxu0 0.0
        %420 = vmatprep.subr.mxu0 0.0
        %421 = vmatpush1.msra.mxu0 0.0
        %422 = vmatprep.subr.mxu0 0.0
        %423 = vmatpush1.msra.mxu0 0.0
        %424 = vmatprep.subr.mxu0 0.0
        %425 = vmatpush1.msra.mxu0 0.0
        %426 = vmatprep.subr.mxu0 0.0
        %427 = vmatpush1.msra.mxu0 0.0
        %428 = vmatprep.subr.mxu0 0.0
        %429 = vmatpush1.msra.mxu0 0.0
        %430 = vmatprep.subr.mxu0 0.0
        %431 = vmatpush1.msra.mxu0 0.0
        %432 = vmatprep.subr.mxu0 0.0
        %433 = vmatpush1.msra.mxu0 0.0
        %434 = vmatprep.subr.mxu0 0.0
        %435 = vmatpush1.msra.mxu0 0.0
        %436 = vmatprep.subr.mxu0 0.0
        %437 = vmatpush1.msra.mxu0 0.0
        %438 = vmatprep.subr.mxu0 0.0
        %439 = vmatpush1.msra.mxu0 0.0
        %440 = vmatprep.subr.mxu0 0.0
        %441 = vmatpush1.msra.mxu0 0.0
        %442 = vmatprep.subr.mxu0 0.0
        %443 = vmatpush1.msra.mxu0 0.0
        %444 = vmatprep.mubr.f32.mxu0 0.0
        %445 = vmatmul.mubr.f32.gmra.mrb[0].mxu0 %v362
        %v446 = vpop.f32.mrb[0].mxu0
        %v447 = vadd.f32 0.0, %v446
        %v448 = vpop.f32.mrb[0].mxu0
        %v449 = vadd.f32 0.0, %v448
        %450 = vmatprep.mubr.f32.mxu0 0.0
        %451 = vmatmul.mubr.f32.gmra.mrb[0].mxu0 %v365
        %v452 = vpop.f32.mrb[0].mxu0
        %v453 = vadd.f32 0.0, %v452
        %v454 = vpop.f32.mrb[0].mxu0
        %v455 = vadd.f32 0.0, %v454
        %456 = vmatprep.mubr.f32.mxu0 0.0
        %457 = vmatmul.mubr.f32.gmra.mrb[0].mxu0 %v368
        %v458 = vpop.f32.mrb[0].mxu0
        %v459 = vadd.f32 0.0, %v458
        %v460 = vpop.f32.mrb[0].mxu0
        %v461 = vadd.f32 0.0, %v460
        %462 = vdwg.mxu0
        %463 = vmatprep.subr.mxu0 0.0
        %464 = vmatpush1.msra.mxu0 %v353
        %465 = vmatprep.subr.mxu0 0.0
        %466 = vmatpush1.msra.mxu0 %v378
        %467 = vmatprep.subr.mxu0 0.0
        %468 = vmatpush1.msra.mxu0 0.0
        %469 = vmatprep.subr.mxu0 0.0
        %470 = vmatpush1.msra.mxu0 0.0
        %471 = vmatprep.subr.mxu0 0.0
        %472 = vmatpush1.msra.mxu0 0.0
        %473 = vmatprep.subr.mxu0 0.0
        %474 = vmatpush1.msra.mxu0 0.0
        %475 = vmatprep.subr.mxu0 0.0
        %476 = vmatpush1.msra.mxu0 0.0
        %477 = vmatprep.subr.mxu0 0.0
        %478 = vmatpush1.msra.mxu0 0.0
        %479 = vmatprep.subr.mxu0 0.0
        %480 = vmatpush1.msra.mxu0 0.0
        %481 = vmatprep.subr.mxu0 0.0
        %482 = vmatpush1.msra.mxu0 0.0
        %483 = vmatprep.subr.mxu0 0.0
        %484 = vmatpush1.msra.mxu0 0.0
        %485 = vmatprep.subr.mxu0 0.0
        %486 = vmatpush1.msra.mxu0 0.0
        %487 = vmatprep.subr.mxu0 0.0
        %488 = vmatpush1.msra.mxu0 0.0
        %489 = vmatprep.subr.mxu0 0.0
        %490 = vmatpush1.msra.mxu0 0.0
        %491 = vmatprep.subr.mxu0 0.0
        %492 = vmatpush1.msra.mxu0 0.0
        %493 = vmatprep.subr.mxu0 0.0
        %494 = vmatpush1.msra.mxu0 0.0
        %495 = vmatprep.subr.mxu0 0.0
        %496 = vmatpush1.msra.mxu0 0.0
        %497 = vmatprep.subr.mxu0 0.0
        %498 = vmatpush1.msra.mxu0 0.0
        %499 = vmatprep.subr.mxu0 0.0
        %500 = vmatpush1.msra.mxu0 0.0
        %501 = vmatprep.subr.mxu0 0.0
        %502 = vmatpush1.msra.mxu0 0.0
        %503 = vmatprep.subr.mxu0 0.0
        %504 = vmatpush1.msra.mxu0 0.0
        %505 = vmatprep.subr.mxu0 0.0
        %506 = vmatpush1.msra.mxu0 0.0
        %507 = vmatprep.subr.mxu0 0.0
        %508 = vmatpush1.msra.mxu0 0.0
        %509 = vmatprep.subr.mxu0 0.0
        %510 = vmatpush1.msra.mxu0 0.0
        %511 = vmatprep.subr.mxu0 0.0
        %512 = vmatpush1.msra.mxu0 0.0
        %513 = vmatprep.subr.mxu0 0.0
        %514 = vmatpush1.msra.mxu0 0.0
        %515 = vmatprep.subr.mxu0 0.0
        %516 = vmatpush1.msra.mxu0 0.0
        %517 = vmatprep.subr.mxu0 0.0
        %518 = vmatpush1.msra.mxu0 0.0
        %519 = vmatprep.subr.mxu0 0.0
        %520 = vmatpush1.msra.mxu0 0.0
        %521 = vmatprep.subr.mxu0 0.0
        %522 = vmatpush1.msra.mxu0 0.0
        %523 = vmatprep.subr.mxu0 0.0
        %524 = vmatpush1.msra.mxu0 0.0
        %525 = vmatprep.subr.mxu0 0.0
        %526 = vmatpush1.msra.mxu0 0.0
        %527 = vmatprep.mubr.f32.mxu0 0.0
        %528 = vmatmul.mubr.f32.gmra.mrb[0].mxu0 %v362
        %v529 = vpop.f32.mrb[0].mxu0
        %v530 = vadd.f32 0.0, %v529
        %v531 = vpop.f32.mrb[0].mxu0
        %532 = vmatprep.mubr.f32.mxu0 0.0
        %533 = vmatmul.mubr.f32.gmra.mrb[0].mxu0 %v365
        %v534 = vpop.f32.mrb[0].mxu0
        %v535 = vadd.f32 0.0, %v534
        %v536 = vpop.f32.mrb[0].mxu0
        %537 = vmatprep.mubr.f32.mxu0 0.0
        %538 = vmatmul.mubr.f32.gmra.mrb[0].mxu0 %v368
        %v539 = vpop.f32.mrb[0].mxu0
        %v540 = vadd.f32 0.0, %v539
        %v541 = vpop.f32.mrb[0].mxu0
        %542 = vdwg.mxu0
        %v543 = vmax.f32 %v447, 0.0
        %v544 = vmax.f32 %v449, 0.0
        %v545 = vmax.f32 %v530, 0.0
        %v546 = vmax.f32 %v453, 0.0
        %v547 = vmax.f32 %v455, 0.0
        %v548 = vmax.f32 %v535, 0.0
        %v549 = vmax.f32 %v459, 0.0
        %v550 = vmax.f32 %v461, 0.0
        %v551 = vmax.f32 %v540, 0.0
        %v552 = vmin.f32 %v543, 1.0
        %v553 = vmin.f32 %v544, 1.0
        %v554 = vmin.f32 %v545, 1.0
        %v555 = vmin.f32 %v546, 1.0
        %v556 = vmin.f32 %v547, 1.0
        %v557 = vmin.f32 %v548, 1.0
        %v558 = vmin.f32 %v549, 1.0
        %v559 = vmin.f32 %v550, 1.0
        %v560 = vmin.f32 %v551, 1.0
        %v561 = vld [vmem:[%s1 + $0x30] sm:$0xff]
        %v562 = vld [vmem:[%s1 + $0x38] sm:$0x7]
        %vm563 = vcmask 171008
        %v565 = vsel %vm563, %v561, 0
        %v568 = vsel %vm563, %v562, 0
        %vm570 = vcmask 1044480
        %v572 = vsel %vm570, %v558, 0
        %v575 = vsel %vm570, %v559, 0
        %v578 = vsel %vm570, %v560, 0
        %580 = vmatprep.subr.mxu0 %v553
        %581 = vmatpush1.msra.mxu0 %v552
        %582 = vmatprep.subr.mxu0 %v556
        %583 = vmatpush1.msra.mxu0 %v555
        %584 = vmatprep.subr.mxu0 %v575
        %585 = vmatpush1.msra.mxu0 %v572
        %586 = vmatprep.subr.mxu0 0.0
        %587 = vmatpush1.msra.mxu0 0.0
        %588 = vmatprep.subr.mxu0 0.0
        %589 = vmatpush1.msra.mxu0 0.0
        %590 = vmatprep.subr.mxu0 0.0
        %591 = vmatpush1.msra.mxu0 0.0
        %592 = vmatprep.subr.mxu0 0.0
        %593 = vmatpush1.msra.mxu0 0.0
        %594 = vmatprep.subr.mxu0 0.0
        %595 = vmatpush1.msra.mxu0 0.0
        %596 = vmatprep.subr.mxu0 0.0
        %597 = vmatpush1.msra.mxu0 0.0
        %598 = vmatprep.subr.mxu0 0.0
        %599 = vmatpush1.msra.mxu0 0.0
        %600 = vmatprep.subr.mxu0 0.0
        %601 = vmatpush1.msra.mxu0 0.0
        %602 = vmatprep.subr.mxu0 0.0
        %603 = vmatpush1.msra.mxu0 0.0
        %604 = vmatprep.subr.mxu0 0.0
        %605 = vmatpush1.msra.mxu0 0.0
        %606 = vmatprep.subr.mxu0 0.0
        %607 = vmatpush1.msra.mxu0 0.0
        %608 = vmatprep.subr.mxu0 0.0
        %609 = vmatpush1.msra.mxu0 0.0
        %610 = vmatprep.subr.mxu0 0.0
        %611 = vmatpush1.msra.mxu0 0.0
        %612 = vmatprep.subr.mxu0 0.0
        %613 = vmatpush1.msra.mxu0 0.0
        %614 = vmatprep.subr.mxu0 0.0
        %615 = vmatpush1.msra.mxu0 0.0
        %616 = vmatprep.subr.mxu0 0.0
        %617 = vmatpush1.msra.mxu0 0.0
        %618 = vmatprep.subr.mxu0 0.0
        %619 = vmatpush1.msra.mxu0 0.0
        %620 = vmatprep.subr.mxu0 0.0
        %621 = vmatpush1.msra.mxu0 0.0
        %622 = vmatprep.subr.mxu0 0.0
        %623 = vmatpush1.msra.mxu0 0.0
        %624 = vmatprep.subr.mxu0 0.0
        %625 = vmatpush1.msra.mxu0 0.0
        %626 = vmatprep.subr.mxu0 0.0
        %627 = vmatpush1.msra.mxu0 0.0
        %628 = vmatprep.subr.mxu0 0.0
        %629 = vmatpush1.msra.mxu0 0.0
        %630 = vmatprep.subr.mxu0 0.0
        %631 = vmatpush1.msra.mxu0 0.0
        %632 = vmatprep.subr.mxu0 0.0
        %633 = vmatpush1.msra.mxu0 0.0
        %634 = vmatprep.subr.mxu0 0.0
        %635 = vmatpush1.msra.mxu0 0.0
        %636 = vmatprep.subr.mxu0 0.0
        %637 = vmatpush1.msra.mxu0 0.0
        %638 = vmatprep.subr.mxu0 0.0
        %639 = vmatpush1.msra.mxu0 0.0
        %640 = vmatprep.subr.mxu0 0.0
        %641 = vmatpush1.msra.mxu0 0.0
        %642 = vmatprep.subr.mxu0 0.0
        %643 = vmatpush1.msra.mxu0 0.0
        %644 = vmatprep.mubr.f32.mxu0 0.0
        %645 = vmatmul.mubr.f32.gmra.mrb[0].mxu0 %v565
        %v646 = vpop.f32.mrb[0].mxu0
        %v647 = vadd.f32 0.0, %v646
        %v648 = vpop.f32.mrb[0].mxu0
        %v649 = vadd.f32 0.0, %v648
        %650 = vmatprep.mubr.f32.mxu0 0.0
        %651 = vmatmul.mubr.f32.gmra.mrb[0].mxu0 %v568
        %v652 = vpop.f32.mrb[0].mxu0
        %v653 = vadd.f32 0.0, %v652
        %v654 = vpop.f32.mrb[0].mxu0
        %v655 = vadd.f32 0.0, %v654
        %656 = vdwg.mxu0
        %657 = vmatprep.subr.mxu0 0.0
        %658 = vmatpush1.msra.mxu0 %v554
        %659 = vmatprep.subr.mxu0 0.0
        %660 = vmatpush1.msra.mxu0 %v557
        %661 = vmatprep.subr.mxu0 0.0
        %662 = vmatpush1.msra.mxu0 %v578
        %663 = vmatprep.subr.mxu0 0.0
        %664 = vmatpush1.msra.mxu0 0.0
        %665 = vmatprep.subr.mxu0 0.0
        %666 = vmatpush1.msra.mxu0 0.0
        %667 = vmatprep.subr.mxu0 0.0
        %668 = vmatpush1.msra.mxu0 0.0
        %669 = vmatprep.subr.mxu0 0.0
        %670 = vmatpush1.msra.mxu0 0.0
        %671 = vmatprep.subr.mxu0 0.0
        %672 = vmatpush1.msra.mxu0 0.0
        %673 = vmatprep.subr.mxu0 0.0
        %674 = vmatpush1.msra.mxu0 0.0
        %675 = vmatprep.subr.mxu0 0.0
        %676 = vmatpush1.msra.mxu0 0.0
        %677 = vmatprep.subr.mxu0 0.0
        %678 = vmatpush1.msra.mxu0 0.0
        %679 = vmatprep.subr.mxu0 0.0
        %680 = vmatpush1.msra.mxu0 0.0
        %681 = vmatprep.subr.mxu0 0.0
        %682 = vmatpush1.msra.mxu0 0.0
        %683 = vmatprep.subr.mxu0 0.0
        %684 = vmatpush1.msra.mxu0 0.0
        %685 = vmatprep.subr.mxu0 0.0
        %686 = vmatpush1.msra.mxu0 0.0
        %687 = vmatprep.subr.mxu0 0.0
        %688 = vmatpush1.msra.mxu0 0.0
        %689 = vmatprep.subr.mxu0 0.0
        %690 = vmatpush1.msra.mxu0 0.0
        %691 = vmatprep.subr.mxu0 0.0
        %692 = vmatpush1.msra.mxu0 0.0
        %693 = vmatprep.subr.mxu0 0.0
        %694 = vmatpush1.msra.mxu0 0.0
        %695 = vmatprep.subr.mxu0 0.0
        %696 = vmatpush1.msra.mxu0 0.0
        %697 = vmatprep.subr.mxu0 0.0
        %698 = vmatpush1.msra.mxu0 0.0
        %699 = vmatprep.subr.mxu0 0.0
        %700 = vmatpush1.msra.mxu0 0.0
        %701 = vmatprep.subr.mxu0 0.0
        %702 = vmatpush1.msra.mxu0 0.0
        %703 = vmatprep.subr.mxu0 0.0
        %704 = vmatpush1.msra.mxu0 0.0
        %705 = vmatprep.subr.mxu0 0.0
        %706 = vmatpush1.msra.mxu0 0.0
        %707 = vmatprep.subr.mxu0 0.0
        %708 = vmatpush1.msra.mxu0 0.0
        %709 = vmatprep.subr.mxu0 0.0
        %710 = vmatpush1.msra.mxu0 0.0
        %711 = vmatprep.subr.mxu0 0.0
        %712 = vmatpush1.msra.mxu0 0.0
        %713 = vmatprep.subr.mxu0 0.0
        %714 = vmatpush1.msra.mxu0 0.0
        %715 = vmatprep.subr.mxu0 0.0
        %716 = vmatpush1.msra.mxu0 0.0
        %717 = vmatprep.subr.mxu0 0.0
        %718 = vmatpush1.msra.mxu0 0.0
        %719 = vmatprep.subr.mxu0 0.0
        %720 = vmatpush1.msra.mxu0 0.0
        %721 = vmatprep.mubr.f32.mxu0 0.0
        %722 = vmatmul.mubr.f32.gmra.mrb[0].mxu0 %v565
        %v723 = vpop.f32.mrb[0].mxu0
        %v724 = vadd.f32 0.0, %v723
        %v725 = vpop.f32.mrb[0].mxu0
        %726 = vmatprep.mubr.f32.mxu0 0.0
        %727 = vmatmul.mubr.f32.gmra.mrb[0].mxu0 %v568
        %v728 = vpop.f32.mrb[0].mxu0
        %v729 = vadd.f32 0.0, %v728
        %v730 = vpop.f32.mrb[0].mxu0
        %731 = vdwg.mxu0
        %v732 = vmax.f32 %v647, 0.0
        %v733 = vmax.f32 %v649, 0.0
        %v734 = vmax.f32 %v724, 0.0
        %v735 = vmax.f32 %v653, 0.0
        %v736 = vmax.f32 %v655, 0.0
        %v737 = vmax.f32 %v729, 0.0
        %v738 = vld [vmem:[%s1 + $0x48] sm:$0x1]
        %v740 = vsel %vm360, %v738, 0
        %v743 = vsel %vm370, %v735, 0
        %v746 = vsel %vm370, %v736, 0
        %v749 = vsel %vm370, %v737, 0
        %751 = vmatprep.subr.mxu0 %v733
        %752 = vmatpush1.msra.mxu0 %v732
        %753 = vmatprep.subr.mxu0 %v746
        %754 = vmatpush1.msra.mxu0 %v743
        %755 = vmatprep.subr.mxu0 0.0
        %756 = vmatpush1.msra.mxu0 0.0
        %757 = vmatprep.subr.mxu0 0.0
        %758 = vmatpush1.msra.mxu0 0.0
        %759 = vmatprep.subr.mxu0 0.0
        %760 = vmatpush1.msra.mxu0 0.0
        %761 = vmatprep.subr.mxu0 0.0
        %762 = vmatpush1.msra.mxu0 0.0
        %763 = vmatprep.subr.mxu0 0.0
        %764 = vmatpush1.msra.mxu0 0.0
        %765 = vmatprep.subr.mxu0 0.0
        %766 = vmatpush1.msra.mxu0 0.0
        %767 = vmatprep.subr.mxu0 0.0
        %768 = vmatpush1.msra.mxu0 0.0
        %769 = vmatprep.subr.mxu0 0.0
        %770 = vmatpush1.msra.mxu0 0.0
        %771 = vmatprep.subr.mxu0 0.0
        %772 = vmatpush1.msra.mxu0 0.0
        %773 = vmatprep.subr.mxu0 0.0
        %774 = vmatpush1.msra.mxu0 0.0
        %775 = vmatprep.subr.mxu0 0.0
        %776 = vmatpush1.msra.mxu0 0.0
        %777 = vmatprep.subr.mxu0 0.0
        %778 = vmatpush1.msra.mxu0 0.0
        %779 = vmatprep.subr.mxu0 0.0
        %780 = vmatpush1.msra.mxu0 0.0
        %781 = vmatprep.subr.mxu0 0.0
        %782 = vmatpush1.msra.mxu0 0.0
        %783 = vmatprep.subr.mxu0 0.0
        %784 = vmatpush1.msra.mxu0 0.0
        %785 = vmatprep.subr.mxu0 0.0
        %786 = vmatpush1.msra.mxu0 0.0
        %787 = vmatprep.subr.mxu0 0.0
        %788 = vmatpush1.msra.mxu0 0.0
        %789 = vmatprep.subr.mxu0 0.0
        %790 = vmatpush1.msra.mxu0 0.0
        %791 = vmatprep.subr.mxu0 0.0
        %792 = vmatpush1.msra.mxu0 0.0
        %793 = vmatprep.subr.mxu0 0.0
        %794 = vmatpush1.msra.mxu0 0.0
        %795 = vmatprep.subr.mxu0 0.0
        %796 = vmatpush1.msra.mxu0 0.0
        %797 = vmatprep.subr.mxu0 0.0
        %798 = vmatpush1.msra.mxu0 0.0
        %799 = vmatprep.subr.mxu0 0.0
        %800 = vmatpush1.msra.mxu0 0.0
        %801 = vmatprep.subr.mxu0 0.0
        %802 = vmatpush1.msra.mxu0 0.0
        %803 = vmatprep.subr.mxu0 0.0
        %804 = vmatpush1.msra.mxu0 0.0
        %805 = vmatprep.subr.mxu0 0.0
        %806 = vmatpush1.msra.mxu0 0.0
        %807 = vmatprep.subr.mxu0 0.0
        %808 = vmatpush1.msra.mxu0 0.0
        %809 = vmatprep.subr.mxu0 0.0
        %810 = vmatpush1.msra.mxu0 0.0
        %811 = vmatprep.subr.mxu0 0.0
        %812 = vmatpush1.msra.mxu0 0.0
        %813 = vmatprep.subr.mxu0 0.0
        %814 = vmatpush1.msra.mxu0 0.0
        %815 = vmatprep.mubr.f32.mxu0 0.0
        %816 = vmatmul.mubr.f32.gmra.mrb[0].mxu0 %v740
        %v817 = vpop.f32.mrb[0].mxu0
        %v818 = vadd.f32 0.0, %v817
        %v819 = vpop.f32.mrb[0].mxu0
        %v820 = vadd.f32 0.0, %v819
        %821 = vdwg.mxu0
        %822 = vmatprep.subr.mxu0 0.0
        %823 = vmatpush1.msra.mxu0 %v734
        %824 = vmatprep.subr.mxu0 0.0
        %825 = vmatpush1.msra.mxu0 %v749
        %826 = vmatprep.subr.mxu0 0.0
        %827 = vmatpush1.msra.mxu0 0.0
        %828 = vmatprep.subr.mxu0 0.0
        %829 = vmatpush1.msra.mxu0 0.0
        %830 = vmatprep.subr.mxu0 0.0
        %831 = vmatpush1.msra.mxu0 0.0
        %832 = vmatprep.subr.mxu0 0.0
        %833 = vmatpush1.msra.mxu0 0.0
        %834 = vmatprep.subr.mxu0 0.0
        %835 = vmatpush1.msra.mxu0 0.0
        %836 = vmatprep.subr.mxu0 0.0
        %837 = vmatpush1.msra.mxu0 0.0
        %838 = vmatprep.subr.mxu0 0.0
        %839 = vmatpush1.msra.mxu0 0.0
        %840 = vmatprep.subr.mxu0 0.0
        %841 = vmatpush1.msra.mxu0 0.0
        %842 = vmatprep.subr.mxu0 0.0
        %843 = vmatpush1.msra.mxu0 0.0
        %844 = vmatprep.subr.mxu0 0.0
        %845 = vmatpush1.msra.mxu0 0.0
        %846 = vmatprep.subr.mxu0 0.0
        %847 = vmatpush1.msra.mxu0 0.0
        %848 = vmatprep.subr.mxu0 0.0
        %849 = vmatpush1.msra.mxu0 0.0
        %850 = vmatprep.subr.mxu0 0.0
        %851 = vmatpush1.msra.mxu0 0.0
        %852 = vmatprep.subr.mxu0 0.0
        %853 = vmatpush1.msra.mxu0 0.0
        %854 = vmatprep.subr.mxu0 0.0
        %855 = vmatpush1.msra.mxu0 0.0
        %856 = vmatprep.subr.mxu0 0.0
        %857 = vmatpush1.msra.mxu0 0.0
        %858 = vmatprep.subr.mxu0 0.0
        %859 = vmatpush1.msra.mxu0 0.0
        %860 = vmatprep.subr.mxu0 0.0
        %861 = vmatpush1.msra.mxu0 0.0
        %862 = vmatprep.subr.mxu0 0.0
        %863 = vmatpush1.msra.mxu0 0.0
        %864 = vmatprep.subr.mxu0 0.0
        %865 = vmatpush1.msra.mxu0 0.0
        %866 = vmatprep.subr.mxu0 0.0
        %867 = vmatpush1.msra.mxu0 0.0
        %868 = vmatprep.subr.mxu0 0.0
        %869 = vmatpush1.msra.mxu0 0.0
        %870 = vmatprep.subr.mxu0 0.0
        %871 = vmatpush1.msra.mxu0 0.0
        %872 = vmatprep.subr.mxu0 0.0
        %873 = vmatpush1.msra.mxu0 0.0
        %874 = vmatprep.subr.mxu0 0.0
        %875 = vmatpush1.msra.mxu0 0.0
        %876 = vmatprep.subr.mxu0 0.0
        %877 = vmatpush1.msra.mxu0 0.0
        %878 = vmatprep.subr.mxu0 0.0
        %879 = vmatpush1.msra.mxu0 0.0
        %880 = vmatprep.subr.mxu0 0.0
        %881 = vmatpush1.msra.mxu0 0.0
        %882 = vmatprep.subr.mxu0 0.0
        %883 = vmatpush1.msra.mxu0 0.0
        %884 = vmatprep.subr.mxu0 0.0
        %885 = vmatpush1.msra.mxu0 0.0
        %886 = vmatprep.mubr.f32.mxu0 0.0
        %887 = vmatmul.mubr.f32.gmra.mrb[0].mxu0 %v740
        %v888 = vpop.f32.mrb[0].mxu0
        %v889 = vadd.f32 0.0, %v888
        %v890 = vpop.f32.mrb[0].mxu0
        %891 = vdwg.mxu0
        %v895 = vcombine.low %v818, %v820
        %v897 = vunpack.c.l.s4 1966171168
        %v898 = vunpack.c.0.s8 %v897
        %v899 = vlaneseq
        %v900 = vshrl.u32 %v899, 7
        %v901 = vsub.s32 %v898, %v900
        %v902 = vrot.slane %v895, %v901
        %v904 = vunpack.c.l.s4 1966171168
        %v905 = vunpack.c.0.s8 %v904
        %v906 = vlaneseq
        %v907 = vshrl.u32 %v906, 7
        %v908 = vsub.s32 %v905, %v907
        %v909 = vrot.slane %v889, %v908
        %v910 = vcombine.low %v902, %v909
        %v912 = vunpack.c.l.s4 1966171168
        %v913 = vunpack.c.0.s8 %v912
        %v914 = vlaneseq
        %v915 = vshrl.u32 %v914, 7
        %v916 = vsub.s32 %v913, %v915
        %v917 = vrot.slane %v910, %v916
        %v919 = vlaneseq
        %vm920 = vcmp.ge.s32.totalorder %v919, 0
        %vm921 = vcmp.lt.s32.totalorder %v919, 384
        %vm922 = vmand %vm920, %vm921
        %923 = vst.msk [vmem:[%s172] sm:$0x7] %vm922, %v917
        %s924 = smul.u32 3, %s13
        %p925 = scmp.lt.s32.totalorder %s924, 5
        %s926 = scalar_select %p925, %s924, 5
        %s927 = scalar_lea.vmem %s2, %s926
        // Predicated region
        $region52: #{mlp_relu_dummy_pallas.1} parent=46 // pred_check
          %p928 = pneg %p78
        $region53: #{mlp_relu_dummy_pallas.1} parent=46 // pred_check_branch
          %930 = sbr.rel (%p928) target = $region55
        $region54: #{mlp_relu_dummy_pallas.1} parent=46 // pred_region
          %s931 = smul.u32 3, %s13
        $region55: #{mlp_relu_dummy_pallas.1} parent=46 // pred_fallthru
          _
      $region47: #{mlp_relu_dummy_pallas.1} parent=5 // pred_fallthru
        _
      %p932 = scmp.le.s32.totalorder 2, %s8
      // Predicated region
      $region56: #{mlp_relu_dummy_pallas.1} parent=5 // pred_check
        %p933 = pneg %p932
      $region57: #{mlp_relu_dummy_pallas.1} parent=5 // pred_check_branch
        %935 = sbr.rel (%p933) target = $region59
      $region58: #{mlp_relu_dummy_pallas.1} parent=5 // pred_region
        %s936 = ssub.s32 %s8, 2
        // Predicated region
        $region60: #{mlp_relu_dummy_pallas.1} parent=58 // pred_check
          %p937 = pneg %p84
        $region61: #{mlp_relu_dummy_pallas.1} parent=58 // pred_check_branch
          %939 = sbr.rel (%p937) target = $region63
        $region62: #{mlp_relu_dummy_pallas.1} parent=58 // pred_region
          %s940 = smul.u32 3, %s14
          %p941 = scmp.lt.s32.totalorder %s940, 5
          %s942 = scalar_select %p941, %s940, 5
          %s943 = scalar_lea.vmem %s2, %s942
        $region63: #{mlp_relu_dummy_pallas.1} parent=58 // pred_fallthru
          _
      $region59: #{mlp_relu_dummy_pallas.1} parent=5 // pred_fallthru
        _
    $region6: #{mlp_relu_dummy_pallas.1} parent=1 // loop_footer
      %s12 = sadd.s32 1, %s8
    $region7: #{mlp_relu_dummy_pallas.1} parent=1 // loop_footer_branch
      %7 = sbr.rel target = $region3
    $region8: #{mlp_relu_dummy_pallas.1} parent=1 // loop_exit
      _

</llo_original>
